<compile_context>
chip_gen: v5e
topology: v5e:2x2
jax: 0.10.0
libtpu: 0.0.40
codegen_flags: <defaults>
</compile_context>

<pallas_src>
import functools

import jax
import jax.numpy as jnp
from jax.experimental import pallas as pl
from jax.experimental.pallas import tpu as pltpu


def _combine_kernel(node_ref, agg_ref, w_ref, b_ref, o_ref, *, n_node_tiles):
    i = pl.program_id(0)
    # Both row tiles are VMEM-resident; the extra vld + VPU select is free
    # filler in this HBM-bound kernel and keeps a single MXU + epilogue path.
    x_node = node_ref[...].astype(jnp.bfloat16)   # no-op cast when input is bf16
    x_agg = agg_ref[...].astype(jnp.bfloat16)
    x = jnp.where(i < n_node_tiles, x_node, x_agg)
    # Weight kept in nn.Linear (D_out, D_in) layout; contract the last dims
    # (trans_b style).  bf16 MXU inputs, f32 accumulation.
    y = jnp.dot(x, w_ref[...].T, preferred_element_type=jnp.float32)
    y = y + b_ref[...]
    o_ref[...] = jnp.maximum(y, 0.0).astype(o_ref.dtype)


def _pick_row_tile(n_node, requested):
    """Largest row tile <= `requested` that is a multiple of 8 and divides
    n_node, so the node/aggregated output halves are contiguous with zero
    post-processing.  Returns None if no such tile exists (n_node % 8 != 0)."""
    if n_node == 0:
        return requested
    t = min(requested, n_node)
    t -= t % 8
    while t >= 8:
        if n_node % t == 0:
            return t
        t -= 8
    return None


def combine_forward(node_feat, aggregated_feat, weight, bias, *, tile_m=512,
                    out_dtype=jnp.float32):
    """GraphSAGE Combine forward.

    node_feat:       (N, D_in)   f32 or bf16 (bf16 halves input DMA traffic)
    aggregated_feat: (M, D_in)   f32 or bf16
    weight:          (D_out, D_in)  nn.Linear layout (f32 or bf16)
    bias:            (D_out,)
    returns:         (N + M, D_out) = relu(cat([node, agg], 0) @ W.T + b)
    """
    N, d_in = node_feat.shape
    M, d_in2 = aggregated_feat.shape
    assert d_in == d_in2
    d_out, d_in3 = weight.shape
    assert d_in3 == d_in

    if N == 0 and M == 0:
        return jnp.zeros((0, d_out), dtype=out_dtype)

    # Degenerate halves: substitute the non-empty input so pallas_call never
    # sees a zero-row operand (its grid contribution is zero anyway).
    node_src = node_feat if N > 0 else aggregated_feat
    agg_src = aggregated_feat if M > 0 else node_feat

    # No weight transpose pass; cast to bf16 only if the caller didn't already.
    w_in = weight if weight.dtype == jnp.bfloat16 else weight.astype(jnp.bfloat16)
    bias2d = bias.reshape(1, d_out).astype(jnp.float32)

    tm = _pick_row_tile(N, int(tile_m))
    if tm is None:
        # TODO(synk): N not a multiple of 8 -- pad N upstream so the ragged
        # slow path (an extra HBM re-copy of the output) never runs.
        tm = max(int(tile_m) - int(tile_m) % 8, 8)

    n_node_tiles = pl.cdiv(N, tm)
    n_pad = n_node_tiles * tm              # == N whenever tm divides N (fast path)
    n_agg_tiles = pl.cdiv(M, tm)
    grid = (n_node_tiles + n_agg_tiles,)   # >= 2 tiles keeps both v7x TCs busy
    out_rows = n_pad + M

    node_clamp = max(n_node_tiles - 1, 0)
    agg_clamp = max(n_agg_tiles - 1, 0)
    # Clamped index maps: while an input is inactive its block index is held
    # constant, so the pipeline never issues redundant DMAs for it.
    node_map = lambda i: (jnp.minimum(i, node_clamp), 0)
    agg_map = lambda i: (jnp.clip(i - n_node_tiles, 0, agg_clamp), 0)

    # Scoped-VMEM budget from actual tiles: 2x each pipelined operand + the
    # resident weight/bias (+ slack for compiler scratch).
    vmem_limit = int(
        2 * tm * d_in * node_src.dtype.itemsize
        + 2 * tm * d_in * agg_src.dtype.itemsize
        + 2 * tm * d_out * jnp.dtype(out_dtype).itemsize
        + 2 * (d_in * d_out * w_in.dtype.itemsize + d_out * 4)
        + (4 << 20))
    vmem_limit = min(vmem_limit, 64 << 20)

    # TODO(synk): for wide weights (e.g. 2048x2048 bf16) single-buffer the
    # resident weight (pipeline_mode=pl.Buffered(1)) and add a second grid axis
    # tiling d_out in multiples of 256 to fill the 256x256 MXU on v6e/v7x.
    out = pl.pallas_call(
        functools.partial(_combine_kernel, n_node_tiles=n_node_tiles),
        out_shape=jax.ShapeDtypeStruct((out_rows, d_out), out_dtype),
        grid_spec=pltpu.PrefetchScalarGridSpec(
            num_scalar_prefetch=0,
            grid=grid,
            in_specs=[
                pl.BlockSpec((tm, d_in), node_map),              # node rows (pipelined)
                pl.BlockSpec((tm, d_in), agg_map),               # aggregated rows (pipelined)
                pl.BlockSpec((d_out, d_in), lambda i: (0, 0)),   # weight: VMEM-resident
                pl.BlockSpec((1, d_out), lambda i: (0, 0)),      # bias:   VMEM-resident
            ],
            out_specs=pl.BlockSpec((tm, d_out), lambda i: (i, 0)),
        ),
        compiler_params=pltpu.CompilerParams(
            # Row tiles are independent -> megacore sharding on v7x and
            # double-buffered DMA/compute overlap on all generations.
            dimension_semantics=("parallel",),
            vmem_limit_bytes=vmem_limit,
        ),
    )(node_src, agg_src, w_in, bias2d)

    if n_pad == N:
        # Fast path: output rows are already cat-ordered, no re-copy.
        return out
    # Ragged N: drop the pad gap between the two halves (slow path, see TODO).
    return jnp.concatenate([out[:N], out[n_pad:n_pad + M]], axis=0)


if __name__ == "__main__":
    key = jax.random.PRNGKey(0)
    k1, k2, k3, k4 = jax.random.split(key, 4)

    # Small, tile-aligned shapes: 2 node tiles + 2 aggregated tiles at
    # tile_m=512 -> grid of 4 parallel row tiles (even, so v7x megacore
    # shards evenly).
    N, M = 1024, 1024
    input_dim = 128
    output_dim = 128

    # Producer emits bf16 activations (halves the kernel's input DMA traffic;
    # the matmul is bf16 on the MXU either way, with f32 accumulation).
    node_feat = jax.random.normal(k1, (N, input_dim), dtype=jnp.float32).astype(jnp.bfloat16)
    aggregated_feat = jax.random.normal(k2, (M, input_dim), dtype=jnp.float32).astype(jnp.bfloat16)

    # Deterministic synthetic nn.Linear(input_dim, output_dim) parameters,
    # cached once in bf16 / nn.Linear layout outside the hot path.
    bound = 1.0 / jnp.sqrt(jnp.float32(input_dim))
    weight = jax.random.uniform(k3, (output_dim, input_dim),
                                minval=-bound, maxval=bound, dtype=jnp.float32)
    bias = jax.random.uniform(k4, (output_dim,),
                              minval=-bound, maxval=bound, dtype=jnp.float32)
    w_bf16 = weight.astype(jnp.bfloat16)

    out = combine_forward(node_feat, aggregated_feat, w_bf16, bias, tile_m=512)
    out = jax.block_until_ready(out)

    # Reference (pure JAX) with matching precision: bf16 MXU inputs, f32 accum.
    combined = jnp.concatenate([node_feat, aggregated_feat], axis=0)
    ref = jnp.maximum(
        jnp.dot(combined, w_bf16.T, preferred_element_type=jnp.float32) + bias,
        0.0,
    )
    assert out.shape == (N + M, output_dim)
    assert out.dtype == jnp.float32
    assert jnp.allclose(out, ref, atol=2e-2, rtol=2e-2)

    print("KERNEL_OK")
</pallas_src>

<mosaic_0001>
module attributes {stable_mosaic.version = 11 : i64} {
  func.func @_combine_kernel(%arg0: i32, %arg1: memref<512x128xbf16, #tpu.memory_space<vmem>>, %arg2: memref<512x128xbf16, #tpu.memory_space<vmem>>, %arg3: memref<128x128xbf16, #tpu.memory_space<vmem>>, %arg4: memref<1x128xf32, #tpu.memory_space<vmem>>, %arg5: memref<512x128xf32, #tpu.memory_space<vmem>>) attributes {dimension_semantics = [#tpu.dimension_semantics<parallel>], iteration_bounds = array<i64: 4>, scalar_prefetch = 0 : i64, scratch_operands = 0 : i64, tpu.core_type = #tpu.core_type<tc>, window_params = [{transform_indices = @transform_0, window_bounds = array<i64: 512, 128>}, {transform_indices = @transform_1, window_bounds = array<i64: 512, 128>}, {pipeline_mode = #tpu.pipeline_mode<synchronous>, transform_indices = @transform_2, window_bounds = array<i64: 128, 128>}, {pipeline_mode = #tpu.pipeline_mode<synchronous>, transform_indices = @transform_3, window_bounds = array<i64: 1, 128>}, {transform_indices = @transform_4, window_bounds = array<i64: 512, 128>}]} {
    %c0 = arith.constant 0 : index
    %c0_0 = arith.constant 0 : index
    %0 = vector.load %arg1[%c0, %c0_0] : memref<512x128xbf16, #tpu.memory_space<vmem>>, vector<512x128xbf16>
    %c0_1 = arith.constant 0 : index
    %c0_2 = arith.constant 0 : index
    %1 = vector.load %arg2[%c0_1, %c0_2] : memref<512x128xbf16, #tpu.memory_space<vmem>>, vector<512x128xbf16>
    %c2_i32 = arith.constant 2 : i32
    %2 = arith.cmpi slt, %arg0, %c2_i32 : i32
    %3 = arith.select %2, %0, %1 : vector<512x128xbf16>
    %c0_3 = arith.constant 0 : index
    %c0_4 = arith.constant 0 : index
    %4 = vector.load %arg3[%c0_3, %c0_4] : memref<128x128xbf16, #tpu.memory_space<vmem>>, vector<128x128xbf16>
    %5 = tpu.transpose %4, [1, 0] : vector<128x128xbf16> -> vector<128x128xbf16>
    %cst = arith.constant dense<0.000000e+00> : vector<512x128xf32>
    %6 = tpu.matmul %3, %5, %cst {dimension_numbers = #tpu.dot_dimension_numbers<[1], [0], [0], [1], [0, 0, 1, 1], [], []>} : vector<512x128xbf16>, vector<128x128xbf16>, vector<512x128xf32> -> vector<512x128xf32>
    %c0_5 = arith.constant 0 : index
    %c0_6 = arith.constant 0 : index
    %7 = vector.load %arg4[%c0_5, %c0_6] : memref<1x128xf32, #tpu.memory_space<vmem>>, vector<1x128xf32>
    %8 = vector.broadcast %7 : vector<1x128xf32> to vector<512x128xf32>
    %9 = arith.addf %6, %8 : vector<512x128xf32>
    %cst_7 = arith.constant 0.000000e+00 : f32
    %10 = vector.broadcast %cst_7 : f32 to vector<512x128xf32>
    %11 = arith.maximumf %9, %10 : vector<512x128xf32>
    %c0_8 = arith.constant 0 : index
    %c0_9 = arith.constant 0 : index
    %12 = vector.load %arg5[%c0_8, %c0_9] : memref<512x128xf32, #tpu.memory_space<vmem>>, vector<512x128xf32>
    tpu.vector_store %arg5[%c0_8, %c0_9], %11 {strides = array<i32>} : memref<512x128xf32, #tpu.memory_space<vmem>>, vector<512x128xf32>,
    return
  }
  func.func @transform_0(%arg0: i32) -> (i32, i32) {
    %c1_i32 = arith.constant 1 : i32
    %0 = arith.minsi %arg0, %c1_i32 : i32
    %c0_i32 = arith.constant 0 : i32
    %c0_i32_0 = arith.constant 0 : i32
    return %0, %c0_i32 : i32, i32
  }
  func.func @transform_1(%arg0: i32) -> (i32, i32) {
    %c2_i32 = arith.constant 2 : i32
    %0 = arith.subi %arg0, %c2_i32 : i32
    %c0_i32 = arith.constant 0 : i32
    %c1_i32 = arith.constant 1 : i32
    %1 = arith.maxsi %c0_i32, %0 : i32
    %2 = arith.minsi %c1_i32, %1 : i32
    %c0_i32_0 = arith.constant 0 : i32
    %c0_i32_1 = arith.constant 0 : i32
    return %2, %c0_i32_0 : i32, i32
  }
  func.func @transform_2(%arg0: i32) -> (i32, i32) {
    %c0_i32 = arith.constant 0 : i32
    %c0_i32_0 = arith.constant 0 : i32
    %c0_i32_1 = arith.constant 0 : i32
    return %c0_i32, %c0_i32_0 : i32, i32
  }
  func.func @transform_3(%arg0: i32) -> (i32, i32) {
    %c0_i32 = arith.constant 0 : i32
    %c0_i32_0 = arith.constant 0 : i32
    %c0_i32_1 = arith.constant 0 : i32
    return %c0_i32, %c0_i32_0 : i32, i32
  }
  func.func @transform_4(%arg0: i32) -> (i32, i32) {
    %c0_i32 = arith.constant 0 : i32
    %c0_i32_0 = arith.constant 0 : i32
    return %arg0, %c0_i32 : i32, i32
  }
}

</mosaic_0001>

<llo_original>
// kernel: tpu_custom_call.1
$region0: #{tpu_custom_call.1}
  #allocation0 [shape = 'u32[]', space=smem, size = 0x4, offset = 0x4, fixed_abs, tag = 'smem constant byte address 0x4 - core index']
  #allocation1 [shape = 'u32[72,128]{1,0:T(1,128)}', space=vmem, size = 0x9000, scoped, tag = 'internal scratch']
  %s0 = inlined_call_operand.hbm [shape: bf16[1024,128], index: 0, kind: input, shape index: {}]
  %s1 = inlined_call_operand.hbm [shape: bf16[1024,128], index: 1, kind: input, shape index: {}]
  %s2 = inlined_call_operand.hbm [shape: bf16[128,128], index: 2, kind: input, shape index: {}]
  %s3 = inlined_call_operand.vmem [shape: f32[1,128], index: 3, kind: input, shape index: {}]
  %s4 = inlined_call_operand.hbm [shape: f32[2048,128], index: 4, kind: output, shape index: {}]
  %s5 = sld [smem:[#allocation0]]
  $region61: #{tpu_custom_call.1} parent=0
    _
  %s7 = ssub.s32 1, %s5
  %s8 = scalar_select 0, %s7, %s5
  $region1: #{tpu_custom_call.1} parent=0
    #allocation2 [shape = 'u8[262144]{0}', space=vmem, size = 0x40000, scoped, tag = 'input window, operand 0']
    #allocation3 [shape = 's32[2]{0}', space=sflag, size = 0x8, scoped, tag = 'scoped memory for tpu_custom_call.1']
    #allocation4 [shape = 's32[2]{0}', space=sflag, size = 0x8, scoped, tag = 'scoped memory for tpu_custom_call.1']
    #allocation5 [shape = 'u8[262144]{0}', space=vmem, size = 0x40000, scoped, tag = 'input window, operand 1']
    #allocation6 [shape = 's32[2]{0}', space=sflag, size = 0x8, scoped, tag = 'scoped memory for tpu_custom_call.1']
    #allocation7 [shape = 'u8[32768]{0}', space=vmem, size = 0x8000, scoped, tag = 'input window, operand 2, single buffered']
    #allocation8 [shape = 'u8[524288]{0}', space=vmem, size = 0x80000, scoped, tag = 'output window, operand 0']
    %9 = vsyncpa [#allocation3], 0
    %s10 = scalar_lea.sflag [#allocation3], 1
    %11 = vsyncpa %s10, 0
    %12 = vsyncpa [#allocation6], 0
    %s13 = scalar_lea.sflag [#allocation6], 1
    %14 = vsyncpa %s13, 0
    %15 = vsyncpa [#allocation4], 0
    %s16 = scalar_lea.sflag [#allocation4], 1
    %17 = vsyncpa %s16, 0
    loop: start=0, step=1, limit=6
    $region2: #{tpu_custom_call.1} parent=1 // loop_pre_header
      _
    $region3: #{tpu_custom_call.1} parent=1 // loop_header
      %s19 = sphi 0, %s23
      %p20 = scmp.ge.s32.totalorder %s19, 6
      %s33 = sphi 0, %s35
      %s36 = sphi 0, %s33
      %s37 = sphi 0, %s36
      %s53 = sphi 0, %s37
      %s69 = sphi 0, %s71
      %s72 = sphi 0, %s69
      %s73 = sphi 0, %s72
      %s89 = sphi 0, %s73
      %s93 = sphi 0, %s93
      %s95 = sphi 0, %s93
      %s96 = sphi 0, %s95
      %s110 = sphi 0, %s96
      %s114 = sphi 0, %s114
      %s116 = sphi 0, %s114
      %s117 = sphi 0, %s116
      %s131 = sphi 0, %s117
      %s137 = sphi 0, %s139
      %s140 = sphi 0, %s137
      %s141 = sphi 0, %s140
      %s157 = sphi 0, %s141
    $region4: #{tpu_custom_call.1} parent=1 // loop_header_branch
      %22 = sbr.rel (%p20) target = $region8
    $region5: #{tpu_custom_call.1} parent=1 // loop_body
      %s24 = ssub.s32 %s19, 1
      %s25 = ssub.s32 %s19, 2
      %s26 = sadd.s32 %s19, 1
      %p27 = scmp.lt.s32.totalorder %s19, 1
      %s28 = scalar_select %p27, %s19, 1
      %p29 = scmp.lt.s32.totalorder %s26, 1
      %s30 = scalar_select %p29, %s26, 1
      %s31 = ssub.s32 %s28, %s30
      %p32 = scmp.eq.s32.totalorder %s31, 0
      %s34 = sadd.s32 %s33, 1
      %s35 = scalar_select %p32, %s33, %s34
      %p38 = pneg %p32
      %p39 = scmp.eq.s32.totalorder %s19, 3
      %p40 = por %p38, %p39
      %p41 = scmp.ne.s32.totalorder %s33, %s36
      %p42 = scmp.eq.s32.totalorder %s19, 0
      %p43 = por %p41, %p42
      %p44 = scmp.ne.s32.totalorder %s33, %s36
      %p45 = scmp.eq.s32.totalorder %s24, 3
      %p46 = por %p44, %p45
      %p47 = scmp.ne.s32.totalorder %s36, %s37
      %p48 = scmp.eq.s32.totalorder %s24, 0
      %p49 = por %p47, %p48
      %p50 = scmp.ne.s32.totalorder %s36, %s37
      %p51 = scmp.eq.s32.totalorder %s25, 3
      %p52 = por %p50, %p51
      %p54 = scmp.ne.s32.totalorder %s37, %s53
      %p55 = scmp.eq.s32.totalorder %s25, 0
      %p56 = por %p54, %p55
      %s57 = ssub.s32 %s19, 2
      %p58 = scmp.gt.s32.totalorder %s57, 0
      %s59 = scalar_select %p58, %s57, 0
      %p60 = scmp.lt.s32.totalorder %s59, 1
      %s61 = scalar_select %p60, %s59, 1
      %s62 = ssub.s32 %s26, 2
      %p63 = scmp.gt.s32.totalorder %s62, 0
      %s64 = scalar_select %p63, %s62, 0
      %p65 = scmp.lt.s32.totalorder %s64, 1
      %s66 = scalar_select %p65, %s64, 1
      %s67 = ssub.s32 %s61, %s66
      %p68 = scmp.eq.s32.totalorder %s67, 0
      %s70 = sadd.s32 %s69, 1
      %s71 = scalar_select %p68, %s69, %s70
      %p74 = pneg %p68
      %p75 = scmp.eq.s32.totalorder %s19, 3
      %p76 = por %p74, %p75
      %p77 = scmp.ne.s32.totalorder %s69, %s72
      %p78 = scmp.eq.s32.totalorder %s19, 0
      %p79 = por %p77, %p78
      %p80 = scmp.ne.s32.totalorder %s69, %s72
      %p81 = scmp.eq.s32.totalorder %s24, 3
      %p82 = por %p80, %p81
      %p83 = scmp.ne.s32.totalorder %s72, %s73
      %p84 = scmp.eq.s32.totalorder %s24, 0
      %p85 = por %p83, %p84
      %p86 = scmp.ne.s32.totalorder %s72, %s73
      %p87 = scmp.eq.s32.totalorder %s25, 3
      %p88 = por %p86, %p87
      %p90 = scmp.ne.s32.totalorder %s73, %s89
      %p91 = scmp.eq.s32.totalorder %s25, 0
      %p92 = por %p90, %p91
      %s94 = sadd.s32 %s93, 1
      %p97 = scmp.eq.s32.totalorder %s19, 3
      %p98 = scmp.ne.s32.totalorder %s93, %s95
      %p99 = scmp.eq.s32.totalorder %s19, 0
      %p100 = por %p98, %p99
      %p101 = scmp.ne.s32.totalorder %s93, %s95
      %p102 = scmp.eq.s32.totalorder %s24, 3
      %p103 = por %p101, %p102
      %p104 = scmp.ne.s32.totalorder %s95, %s96
      %p105 = scmp.eq.s32.totalorder %s24, 0
      %p106 = por %p104, %p105
      %p107 = scmp.ne.s32.totalorder %s95, %s96
      %p108 = scmp.eq.s32.totalorder %s25, 3
      %p109 = por %p107, %p108
      %p111 = scmp.ne.s32.totalorder %s96, %s110
      %p112 = scmp.eq.s32.totalorder %s25, 0
      %p113 = por %p111, %p112
      %s115 = sadd.s32 %s114, 1
      %p118 = scmp.eq.s32.totalorder %s19, 3
      %p119 = scmp.ne.s32.totalorder %s114, %s116
      %p120 = scmp.eq.s32.totalorder %s19, 0
      %p121 = por %p119, %p120
      %p122 = scmp.ne.s32.totalorder %s114, %s116
      %p123 = scmp.eq.s32.totalorder %s24, 3
      %p124 = por %p122, %p123
      %p125 = scmp.ne.s32.totalorder %s116, %s117
      %p126 = scmp.eq.s32.totalorder %s24, 0
      %p127 = por %p125, %p126
      %p128 = scmp.ne.s32.totalorder %s116, %s117
      %p129 = scmp.eq.s32.totalorder %s25, 3
      %p130 = por %p128, %p129
      %p132 = scmp.ne.s32.totalorder %s117, %s131
      %p133 = scmp.eq.s32.totalorder %s25, 0
      %p134 = por %p132, %p133
      %s135 = ssub.s32 %s19, %s26
      %p136 = scmp.eq.s32.totalorder %s135, 0
      %s138 = sadd.s32 %s137, 1
      %s139 = scalar_select %p136, %s137, %s138
      %p142 = pneg %p136
      %p143 = scmp.eq.s32.totalorder %s19, 3
      %p144 = por %p142, %p143
      %p145 = scmp.ne.s32.totalorder %s137, %s140
      %p146 = scmp.eq.s32.totalorder %s19, 0
      %p147 = por %p145, %p146
      %p148 = scmp.ne.s32.totalorder %s137, %s140
      %p149 = scmp.eq.s32.totalorder %s24, 3
      %p150 = por %p148, %p149
      %p151 = scmp.ne.s32.totalorder %s140, %s141
      %p152 = scmp.eq.s32.totalorder %s24, 0
      %p153 = por %p151, %p152
      %p154 = scmp.ne.s32.totalorder %s140, %s141
      %p155 = scmp.eq.s32.totalorder %s25, 3
      %p156 = por %p154, %p155
      %p158 = scmp.ne.s32.totalorder %s141, %s157
      %p159 = scmp.eq.s32.totalorder %s25, 0
      %p160 = por %p158, %p159
      %p161 = scmp.le.s32.totalorder 1, %s19
      %p162 = scmp.lt.s32.totalorder %s19, 5
      %p163 = pnand %p161, %p162
      %p164 = pneg %p163
      // Predicated region
      $region9: #{tpu_custom_call.1} parent=5 // pred_check
        _
      $region10: #{tpu_custom_call.1} parent=5 // pred_check_branch
        %166 = sbr.rel (%p163) target = $region12
      $region11: #{tpu_custom_call.1} parent=5 // pred_region
        %s167 = ssub.s32 %s19, 1
        // Predicated region
        $region13: #{tpu_custom_call.1} parent=11 // pred_check
          %p168 = pneg %p106
        $region14: #{tpu_custom_call.1} parent=11 // pred_check_branch
          %170 = sbr.rel (%p168) target = $region16
        $region15: #{tpu_custom_call.1} parent=11 // pred_region
          %172 = vsyncadd [#allocation6], 0
          %s173 = sshll.u32 %s2, 4
          %s174 = int_to_ptr.hbm [resolvable:$true] %s173
          %s175 = sshll.u32 [#allocation7], 4
          %s176 = int_to_ptr.vmem [resolvable:$true] %s175
          %181 = dma.hbm_to_vmem [thread:$0]  %s174, 1024, %s176, [#allocation6], 64, 64, 4
        $region16: #{tpu_custom_call.1} parent=11 // pred_fallthru
          _
        // Predicated region
        $region17: #{tpu_custom_call.1} parent=11 // pred_check
          %p182 = pneg %p127
        $region18: #{tpu_custom_call.1} parent=11 // pred_check_branch
          %184 = sbr.rel (%p182) target = $region20
        $region19: #{tpu_custom_call.1} parent=11 // pred_region
          _
        $region20: #{tpu_custom_call.1} parent=11 // pred_fallthru
          _
      $region12: #{tpu_custom_call.1} parent=5 // pred_fallthru
        _
      %p185 = scmp.lt.s32.totalorder %s19, 4
      // Predicated region
      $region21: #{tpu_custom_call.1} parent=5 // pred_check
        %p186 = pneg %p185
      $region22: #{tpu_custom_call.1} parent=5 // pred_check_branch
        %188 = sbr.rel (%p186) target = $region24
      $region23: #{tpu_custom_call.1} parent=5 // pred_region
        // Predicated region
        $region25: #{tpu_custom_call.1} parent=23 // pred_check
          %p189 = pneg %p43
        $region26: #{tpu_custom_call.1} parent=23 // pred_check_branch
          %191 = sbr.rel (%p189) target = $region28
        $region27: #{tpu_custom_call.1} parent=23 // pred_region
          %s192 = sand.u32 %s33, 1
          %s193 = scalar_lea.sflag [#allocation3], %s192
          %s194 = sand.u32 %s33, 1
          %s195 = smul.addr %s194, 256
          %s196 = scalar_lea.vmem [#allocation2], %s195
          %p197 = scmp.lt.s32.totalorder %s19, 1
          %s198 = scalar_select %p197, %s19, 1
          %s199 = smul.u32 64, %s198
          %201 = vsyncadd %s193, 0
          %s202 = smul.addr %s199, 4
          %s203 = scalar_lea.hbm %s0, %s202
          %s204 = sshll.u32 %s203, 4
          %s205 = int_to_ptr.hbm [resolvable:$true] %s204
          %s206 = sshll.u32 %s196, 4
          %s207 = int_to_ptr.vmem [resolvable:$true] %s206
          %212 = dma.hbm_to_vmem [thread:$0]  %s205, 4096, %s207, %s193, 64, 64, 4
        $region28: #{tpu_custom_call.1} parent=23 // pred_fallthru
          _
        // Predicated region
        $region29: #{tpu_custom_call.1} parent=23 // pred_check
          %p213 = pneg %p79
        $region30: #{tpu_custom_call.1} parent=23 // pred_check_branch
          %215 = sbr.rel (%p213) target = $region32
        $region31: #{tpu_custom_call.1} parent=23 // pred_region
          %s216 = sand.u32 %s19, 1
          %s217 = scalar_lea.sflag [#allocation6], %s216
          %s218 = sand.u32 %s69, 1
          %s219 = smul.addr %s218, 256
          %s220 = scalar_lea.vmem [#allocation5], %s219
          %s221 = ssub.s32 %s19, 2
          %p222 = scmp.gt.s32.totalorder %s221, 0
          %s223 = scalar_select %p222, %s221, 0
          %p224 = scmp.lt.s32.totalorder %s223, 1
          %s225 = scalar_select %p224, %s223, 1
          %s226 = smul.u32 64, %s225
          %228 = vsyncadd %s217, 0
          %s229 = smul.addr %s226, 4
          %s230 = scalar_lea.hbm %s1, %s229
          %s231 = sshll.u32 %s230, 4
          %s232 = int_to_ptr.hbm [resolvable:$true] %s231
          %s233 = sshll.u32 %s220, 4
          %s234 = int_to_ptr.vmem [resolvable:$true] %s233
          %239 = dma.hbm_to_vmem [thread:$0]  %s232, 4096, %s234, %s217, 64, 64, 4
        $region32: #{tpu_custom_call.1} parent=23 // pred_fallthru
          _
      $region24: #{tpu_custom_call.1} parent=5 // pred_fallthru
        _
      %p240 = scmp.le.s32.totalorder 1, %s19
      %p241 = scmp.lt.s32.totalorder %s19, 5
      %p242 = pnand %p240, %p241
      %p243 = pneg %p242
      // Predicated region
      $region33: #{tpu_custom_call.1} parent=5 // pred_check
        _
      $region34: #{tpu_custom_call.1} parent=5 // pred_check_branch
        %245 = sbr.rel (%p242) target = $region36
      $region35: #{tpu_custom_call.1} parent=5 // pred_region
        %s246 = ssub.s32 %s19, 1
        %s247 = sand.u32 %s36, 1
        %s248 = scalar_lea.sflag [#allocation3], %s247
        %s249 = sand.u32 %s36, 1
        %s250 = smul.addr %s249, 256
        %s251 = scalar_lea.vmem [#allocation2], %s250
        // Predicated region
        $region37: #{tpu_custom_call.1} parent=35 // pred_check
          %p252 = pneg %p49
        $region38: #{tpu_custom_call.1} parent=35 // pred_check_branch
          %254 = sbr.rel (%p252) target = $region40
        $region39: #{tpu_custom_call.1} parent=35 // pred_region
          %256 = dma.done %s248, 4096
        $region40: #{tpu_custom_call.1} parent=35 // pred_fallthru
          _
        %s257 = sand.u32 %s24, 1
        %s258 = scalar_lea.sflag [#allocation6], %s257
        %s259 = sand.u32 %s72, 1
        %s260 = smul.addr %s259, 256
        %s261 = scalar_lea.vmem [#allocation5], %s260
        // Predicated region
        $region41: #{tpu_custom_call.1} parent=35 // pred_check
          %p262 = pneg %p85
        $region42: #{tpu_custom_call.1} parent=35 // pred_check_branch
          %264 = sbr.rel (%p262) target = $region44
        $region43: #{tpu_custom_call.1} parent=35 // pred_region
          %266 = dma.done %s258, 4096
        $region44: #{tpu_custom_call.1} parent=35 // pred_fallthru
          _
        // Predicated region
        $region45: #{tpu_custom_call.1} parent=35 // pred_check
          %p267 = pneg %p106
        $region46: #{tpu_custom_call.1} parent=35 // pred_check_branch
          %269 = sbr.rel (%p267) target = $region48
        $region47: #{tpu_custom_call.1} parent=35 // pred_region
          %271 = dma.done [#allocation6], 1024
        $region48: #{tpu_custom_call.1} parent=35 // pred_fallthru
          _
        %s272 = sand.u32 %s36, 1
        %s273 = scalar_lea.sflag [#allocation3], %s272
        %s274 = sand.u32 %s36, 1
        %s275 = smul.addr %s274, 256
        %s276 = scalar_lea.vmem [#allocation2], %s275
        %p277 = pneg %p49
        %p278 = pneg %p46
        %s279 = sand.u32 %s24, 1
        %s280 = scalar_lea.sflag [#allocation6], %s279
        %s281 = sand.u32 %s72, 1
        %s282 = smul.addr %s281, 256
        %s283 = scalar_lea.vmem [#allocation5], %s282
        %p284 = pneg %p85
        %p285 = pneg %p82
        %p286 = pneg %p106
        %p287 = pneg %p103
        %p288 = pneg %p127
        %p289 = pneg %p124
        %p290 = pneg %p153
        %p291 = pneg %p150
        %s292 = sand.u32 %s140, 1
        %s293 = scalar_lea.sflag [#allocation4], %s292
        %s294 = sand.u32 %s140, 1
        %s295 = smul.addr %s294, 512
        %s296 = scalar_lea.vmem [#allocation8], %s295
        %p297 = scmp.lt.s32.totalorder %s24, 1
        %s298 = scalar_select %p297, %s24, 1
        %s299 = smul.u32 64, %s298
        %s300 = ssub.s32 %s24, 2
        %p301 = scmp.gt.s32.totalorder %s300, 0
        %s302 = scalar_select %p301, %s300, 0
        %p303 = scmp.lt.s32.totalorder %s302, 1
        %s304 = scalar_select %p303, %s302, 1
        %s305 = smul.u32 64, %s304
        %s306 = smul.u32 64, %s24
        %v307 = vld [vmem:[%s251] sm:$0xf]
        %v308 = vld [vmem:[%s251 + $0x4] sm:$0xf]
        %v309 = vld [vmem:[%s251 + $0x8] sm:$0xf]
        %v310 = vld [vmem:[%s251 + $0xc] sm:$0xf]
        %v311 = vld [vmem:[%s251 + $0x10] sm:$0xf]
        %v312 = vld [vmem:[%s251 + $0x14] sm:$0xf]
        %v313 = vld [vmem:[%s251 + $0x18] sm:$0xf]
        %v314 = vld [vmem:[%s251 + $0x1c] sm:$0xf]
        %v315 = vld [vmem:[%s251 + $0x20] sm:$0xf]
        %v316 = vld [vmem:[%s251 + $0x24] sm:$0xf]
        %v317 = vld [vmem:[%s251 + $0x28] sm:$0xf]
        %v318 = vld [vmem:[%s251 + $0x2c] sm:$0xf]
        %v319 = vld [vmem:[%s251 + $0x30] sm:$0xf]
        %v320 = vld [vmem:[%s251 + $0x34] sm:$0xf]
        %v321 = vld [vmem:[%s251 + $0x38] sm:$0xf]
        %v322 = vld [vmem:[%s251 + $0x3c] sm:$0xf]
        %v323 = vld [vmem:[%s251 + $0x40] sm:$0xf]
        %v324 = vld [vmem:[%s251 + $0x44] sm:$0xf]
        %v325 = vld [vmem:[%s251 + $0x48] sm:$0xf]
        %v326 = vld [vmem:[%s251 + $0x4c] sm:$0xf]
        %v327 = vld [vmem:[%s251 + $0x50] sm:$0xf]
        %v328 = vld [vmem:[%s251 + $0x54] sm:$0xf]
        %v329 = vld [vmem:[%s251 + $0x58] sm:$0xf]
        %v330 = vld [vmem:[%s251 + $0x5c] sm:$0xf]
        %v331 = vld [vmem:[%s251 + $0x60] sm:$0xf]
        %v332 = vld [vmem:[%s251 + $0x64] sm:$0xf]
        %v333 = vld [vmem:[%s251 + $0x68] sm:$0xf]
        %v334 = vld [vmem:[%s251 + $0x6c] sm:$0xf]
        %v335 = vld [vmem:[%s251 + $0x70] sm:$0xf]
        %v336 = vld [vmem:[%s251 + $0x74] sm:$0xf]
        %v337 = vld [vmem:[%s251 + $0x78] sm:$0xf]
        %v338 = vld [vmem:[%s251 + $0x7c] sm:$0xf]
        %v339 = vld [vmem:[%s251 + $0x80] sm:$0xf]
        %v340 = vld [vmem:[%s251 + $0x84] sm:$0xf]
        %v341 = vld [vmem:[%s251 + $0x88] sm:$0xf]
        %v342 = vld [vmem:[%s251 + $0x8c] sm:$0xf]
        %v343 = vld [vmem:[%s251 + $0x90] sm:$0xf]
        %v344 = vld [vmem:[%s251 + $0x94] sm:$0xf]
        %v345 = vld [vmem:[%s251 + $0x98] sm:$0xf]
        %v346 = vld [vmem:[%s251 + $0x9c] sm:$0xf]
        %v347 = vld [vmem:[%s251 + $0xa0] sm:$0xf]
        %v348 = vld [vmem:[%s251 + $0xa4] sm:$0xf]
        %v349 = vld [vmem:[%s251 + $0xa8] sm:$0xf]
        %v350 = vld [vmem:[%s251 + $0xac] sm:$0xf]
        %v351 = vld [vmem:[%s251 + $0xb0] sm:$0xf]
        %v352 = vld [vmem:[%s251 + $0xb4] sm:$0xf]
        %v353 = vld [vmem:[%s251 + $0xb8] sm:$0xf]
        %v354 = vld [vmem:[%s251 + $0xbc] sm:$0xf]
        %v355 = vld [vmem:[%s251 + $0xc0] sm:$0xf]
        %v356 = vld [vmem:[%s251 + $0xc4] sm:$0xf]
        %v357 = vld [vmem:[%s251 + $0xc8] sm:$0xf]
        %v358 = vld [vmem:[%s251 + $0xcc] sm:$0xf]
        %v359 = vld [vmem:[%s251 + $0xd0] sm:$0xf]
        %v360 = vld [vmem:[%s251 + $0xd4] sm:$0xf]
        %v361 = vld [vmem:[%s251 + $0xd8] sm:$0xf]
        %v362 = vld [vmem:[%s251 + $0xdc] sm:$0xf]
        %v363 = vld [vmem:[%s251 + $0xe0] sm:$0xf]
        %v364 = vld [vmem:[%s251 + $0xe4] sm:$0xf]
        %v365 = vld [vmem:[%s251 + $0xe8] sm:$0xf]
        %v366 = vld [vmem:[%s251 + $0xec] sm:$0xf]
        %v367 = vld [vmem:[%s251 + $0xf0] sm:$0xf]
        %v368 = vld [vmem:[%s251 + $0xf4] sm:$0xf]
        %v369 = vld [vmem:[%s251 + $0xf8] sm:$0xf]
        %v370 = vld [vmem:[%s251 + $0xfc] sm:$0xf]
        %v371 = vld [vmem:[%s261] sm:$0xf]
        %v372 = vld [vmem:[%s261 + $0x4] sm:$0xf]
        %v373 = vld [vmem:[%s261 + $0x8] sm:$0xf]
        %v374 = vld [vmem:[%s261 + $0xc] sm:$0xf]
        %v375 = vld [vmem:[%s261 + $0x10] sm:$0xf]
        %v376 = vld [vmem:[%s261 + $0x14] sm:$0xf]
        %v377 = vld [vmem:[%s261 + $0x18] sm:$0xf]
        %v378 = vld [vmem:[%s261 + $0x1c] sm:$0xf]
        %v379 = vld [vmem:[%s261 + $0x20] sm:$0xf]
        %v380 = vld [vmem:[%s261 + $0x24] sm:$0xf]
        %v381 = vld [vmem:[%s261 + $0x28] sm:$0xf]
        %v382 = vld [vmem:[%s261 + $0x2c] sm:$0xf]
        %v383 = vld [vmem:[%s261 + $0x30] sm:$0xf]
        %v384 = vld [vmem:[%s261 + $0x34] sm:$0xf]
        %v385 = vld [vmem:[%s261 + $0x38] sm:$0xf]
        %v386 = vld [vmem:[%s261 + $0x3c] sm:$0xf]
        %v387 = vld [vmem:[%s261 + $0x40] sm:$0xf]
        %v388 = vld [vmem:[%s261 + $0x44] sm:$0xf]
        %v389 = vld [vmem:[%s261 + $0x48] sm:$0xf]
        %v390 = vld [vmem:[%s261 + $0x4c] sm:$0xf]
        %v391 = vld [vmem:[%s261 + $0x50] sm:$0xf]
        %v392 = vld [vmem:[%s261 + $0x54] sm:$0xf]
        %v393 = vld [vmem:[%s261 + $0x58] sm:$0xf]
        %v394 = vld [vmem:[%s261 + $0x5c] sm:$0xf]
        %v395 = vld [vmem:[%s261 + $0x60] sm:$0xf]
        %v396 = vld [vmem:[%s261 + $0x64] sm:$0xf]
        %v397 = vld [vmem:[%s261 + $0x68] sm:$0xf]
        %v398 = vld [vmem:[%s261 + $0x6c] sm:$0xf]
        %v399 = vld [vmem:[%s261 + $0x70] sm:$0xf]
        %v400 = vld [vmem:[%s261 + $0x74] sm:$0xf]
        %v401 = vld [vmem:[%s261 + $0x78] sm:$0xf]
        %v402 = vld [vmem:[%s261 + $0x7c] sm:$0xf]
        %v403 = vld [vmem:[%s261 + $0x80] sm:$0xf]
        %v404 = vld [vmem:[%s261 + $0x84] sm:$0xf]
        %v405 = vld [vmem:[%s261 + $0x88] sm:$0xf]
        %v406 = vld [vmem:[%s261 + $0x8c] sm:$0xf]
        %v407 = vld [vmem:[%s261 + $0x90] sm:$0xf]
        %v408 = vld [vmem:[%s261 + $0x94] sm:$0xf]
        %v409 = vld [vmem:[%s261 + $0x98] sm:$0xf]
        %v410 = vld [vmem:[%s261 + $0x9c] sm:$0xf]
        %v411 = vld [vmem:[%s261 + $0xa0] sm:$0xf]
        %v412 = vld [vmem:[%s261 + $0xa4] sm:$0xf]
        %v413 = vld [vmem:[%s261 + $0xa8] sm:$0xf]
        %v414 = vld [vmem:[%s261 + $0xac] sm:$0xf]
        %v415 = vld [vmem:[%s261 + $0xb0] sm:$0xf]
        %v416 = vld [vmem:[%s261 + $0xb4] sm:$0xf]
        %v417 = vld [vmem:[%s261 + $0xb8] sm:$0xf]
        %v418 = vld [vmem:[%s261 + $0xbc] sm:$0xf]
        %v419 = vld [vmem:[%s261 + $0xc0] sm:$0xf]
        %v420 = vld [vmem:[%s261 + $0xc4] sm:$0xf]
        %v421 = vld [vmem:[%s261 + $0xc8] sm:$0xf]
        %v422 = vld [vmem:[%s261 + $0xcc] sm:$0xf]
        %v423 = vld [vmem:[%s261 + $0xd0] sm:$0xf]
        %v424 = vld [vmem:[%s261 + $0xd4] sm:$0xf]
        %v425 = vld [vmem:[%s261 + $0xd8] sm:$0xf]
        %v426 = vld [vmem:[%s261 + $0xdc] sm:$0xf]
        %v427 = vld [vmem:[%s261 + $0xe0] sm:$0xf]
        %v428 = vld [vmem:[%s261 + $0xe4] sm:$0xf]
        %v429 = vld [vmem:[%s261 + $0xe8] sm:$0xf]
        %v430 = vld [vmem:[%s261 + $0xec] sm:$0xf]
        %v431 = vld [vmem:[%s261 + $0xf0] sm:$0xf]
        %v432 = vld [vmem:[%s261 + $0xf4] sm:$0xf]
        %v433 = vld [vmem:[%s261 + $0xf8] sm:$0xf]
        %v434 = vld [vmem:[%s261 + $0xfc] sm:$0xf]
        %p435 = scmp.lt.s32.totalorder %s24, 2
        %s436 = scalar_select %p435, 1, 0
        %v437 = vstv %s436
        %vm438 = vcmp.eq.s32.totalorder %v437, 1
        %v439 = vsel %vm438, %v307, %v371
        %v440 = vsel %vm438, %v308, %v372
        %v441 = vsel %vm438, %v309, %v373
        %v442 = vsel %vm438, %v310, %v374
        %v443 = vsel %vm438, %v311, %v375
        %v444 = vsel %vm438, %v312, %v376
        %v445 = vsel %vm438, %v313, %v377
        %v446 = vsel %vm438, %v314, %v378
        %v447 = vsel %vm438, %v315, %v379
        %v448 = vsel %vm438, %v316, %v380
        %v449 = vsel %vm438, %v317, %v381
        %v450 = vsel %vm438, %v318, %v382
        %v451 = vsel %vm438, %v319, %v383
        %v452 = vsel %vm438, %v320, %v384
        %v453 = vsel %vm438, %v321, %v385
        %v454 = vsel %vm438, %v322, %v386
        %v455 = vsel %vm438, %v323, %v387
        %v456 = vsel %vm438, %v324, %v388
        %v457 = vsel %vm438, %v325, %v389
        %v458 = vsel %vm438, %v326, %v390
        %v459 = vsel %vm438, %v327, %v391
        %v460 = vsel %vm438, %v328, %v392
        %v461 = vsel %vm438, %v329, %v393
        %v462 = vsel %vm438, %v330, %v394
        %v463 = vsel %vm438, %v331, %v395
        %v464 = vsel %vm438, %v332, %v396
        %v465 = vsel %vm438, %v333, %v397
        %v466 = vsel %vm438, %v334, %v398
        %v467 = vsel %vm438, %v335, %v399
        %v468 = vsel %vm438, %v336, %v400
        %v469 = vsel %vm438, %v337, %v401
        %v470 = vsel %vm438, %v338, %v402
        %v471 = vsel %vm438, %v339, %v403
        %v472 = vsel %vm438, %v340, %v404
        %v473 = vsel %vm438, %v341, %v405
        %v474 = vsel %vm438, %v342, %v406
        %v475 = vsel %vm438, %v343, %v407
        %v476 = vsel %vm438, %v344, %v408
        %v477 = vsel %vm438, %v345, %v409
        %v478 = vsel %vm438, %v346, %v410
        %v479 = vsel %vm438, %v347, %v411
        %v480 = vsel %vm438, %v348, %v412
        %v481 = vsel %vm438, %v349, %v413
        %v482 = vsel %vm438, %v350, %v414
        %v483 = vsel %vm438, %v351, %v415
        %v484 = vsel %vm438, %v352, %v416
        %v485 = vsel %vm438, %v353, %v417
        %v486 = vsel %vm438, %v354, %v418
        %v487 = vsel %vm438, %v355, %v419
        %v488 = vsel %vm438, %v356, %v420
        %v489 = vsel %vm438, %v357, %v421
        %v490 = vsel %vm438, %v358, %v422
        %v491 = vsel %vm438, %v359, %v423
        %v492 = vsel %vm438, %v360, %v424
        %v493 = vsel %vm438, %v361, %v425
        %v494 = vsel %vm438, %v362, %v426
        %v495 = vsel %vm438, %v363, %v427
        %v496 = vsel %vm438, %v364, %v428
        %v497 = vsel %vm438, %v365, %v429
        %v498 = vsel %vm438, %v366, %v430
        %v499 = vsel %vm438, %v367, %v431
        %v500 = vsel %vm438, %v368, %v432
        %v501 = vsel %vm438, %v369, %v433
        %v502 = vsel %vm438, %v370, %v434
        %v503 = vld [vmem:[#allocation7] sm:$0xf]
        %v504 = vld [vmem:[#allocation7 + $0x4] sm:$0xf]
        %v505 = vld [vmem:[#allocation7 + $0x8] sm:$0xf]
        %v506 = vld [vmem:[#allocation7 + $0xc] sm:$0xf]
        %v507 = vld [vmem:[#allocation7 + $0x10] sm:$0xf]
        %v508 = vld [vmem:[#allocation7 + $0x14] sm:$0xf]
        %v509 = vld [vmem:[#allocation7 + $0x18] sm:$0xf]
        %v510 = vld [vmem:[#allocation7 + $0x1c] sm:$0xf]
        %v511 = vld [vmem:[#allocation7 + $0x20] sm:$0xf]
        %v512 = vld [vmem:[#allocation7 + $0x24] sm:$0xf]
        %v513 = vld [vmem:[#allocation7 + $0x28] sm:$0xf]
        %v514 = vld [vmem:[#allocation7 + $0x2c] sm:$0xf]
        %v515 = vld [vmem:[#allocation7 + $0x30] sm:$0xf]
        %v516 = vld [vmem:[#allocation7 + $0x34] sm:$0xf]
        %v517 = vld [vmem:[#allocation7 + $0x38] sm:$0xf]
        %v518 = vld [vmem:[#allocation7 + $0x3c] sm:$0xf]
        %v519 = vld [vmem:[%s3] sm:$0x1]
        %v521 = vperm.slane %v519, 0
        %v587 = vunpack.c.l.b16 %v439
        %v588 = vunpack.c.l.b16 %v440
        %v589 = vunpack.c.l.b16 %v441
        %v590 = vunpack.c.l.b16 %v442
        %v591 = vunpack.c.l.b16 %v443
        %v592 = vunpack.c.l.b16 %v444
        %v593 = vunpack.c.l.b16 %v445
        %v594 = vunpack.c.l.b16 %v446
        %v595 = vunpack.c.l.b16 %v447
        %v596 = vunpack.c.l.b16 %v448
        %v597 = vunpack.c.l.b16 %v449
        %v598 = vunpack.c.l.b16 %v450
        %v599 = vunpack.c.l.b16 %v451
        %v600 = vunpack.c.l.b16 %v452
        %v601 = vunpack.c.l.b16 %v453
        %v602 = vunpack.c.l.b16 %v454
        %v603 = vunpack.c.l.b16 %v455
        %v604 = vunpack.c.l.b16 %v456
        %v605 = vunpack.c.l.b16 %v457
        %v606 = vunpack.c.l.b16 %v458
        %v607 = vunpack.c.l.b16 %v459
        %v608 = vunpack.c.l.b16 %v460
        %v609 = vunpack.c.l.b16 %v461
        %v610 = vunpack.c.l.b16 %v462
        %v611 = vunpack.c.l.b16 %v463
        %v612 = vunpack.c.l.b16 %v464
        %v613 = vunpack.c.l.b16 %v465
        %v614 = vunpack.c.l.b16 %v466
        %v615 = vunpack.c.l.b16 %v467
        %v616 = vunpack.c.l.b16 %v468
        %v617 = vunpack.c.l.b16 %v469
        %v618 = vunpack.c.l.b16 %v470
        %v619 = vunpack.c.l.b16 %v471
        %v620 = vunpack.c.l.b16 %v472
        %v621 = vunpack.c.l.b16 %v473
        %v622 = vunpack.c.l.b16 %v474
        %v623 = vunpack.c.l.b16 %v475
        %v624 = vunpack.c.l.b16 %v476
        %v625 = vunpack.c.l.b16 %v477
        %v626 = vunpack.c.l.b16 %v478
        %v627 = vunpack.c.l.b16 %v479
        %v628 = vunpack.c.l.b16 %v480
        %v629 = vunpack.c.l.b16 %v481
        %v630 = vunpack.c.l.b16 %v482
        %v631 = vunpack.c.l.b16 %v483
        %v632 = vunpack.c.l.b16 %v484
        %v633 = vunpack.c.l.b16 %v485
        %v634 = vunpack.c.l.b16 %v486
        %v635 = vunpack.c.l.b16 %v487
        %v636 = vunpack.c.l.b16 %v488
        %v637 = vunpack.c.l.b16 %v489
        %v638 = vunpack.c.l.b16 %v490
        %v639 = vunpack.c.l.b16 %v491
        %v640 = vunpack.c.l.b16 %v492
        %v641 = vunpack.c.l.b16 %v493
        %v642 = vunpack.c.l.b16 %v494
        %v643 = vunpack.c.l.b16 %v495
        %v644 = vunpack.c.l.b16 %v496
        %v645 = vunpack.c.l.b16 %v497
        %v646 = vunpack.c.l.b16 %v498
        %v647 = vunpack.c.l.b16 %v499
        %v648 = vunpack.c.l.b16 %v500
        %v649 = vunpack.c.l.b16 %v501
        %v650 = vunpack.c.l.b16 %v502
        %v651 = vpack.c.b16 %v588, %v587
        %v652 = vpack.c.b16 %v590, %v589
        %v653 = vpack.c.b16 %v592, %v591
        %v654 = vpack.c.b16 %v594, %v593
        %v655 = vpack.c.b16 %v596, %v595
        %v656 = vpack.c.b16 %v598, %v597
        %v657 = vpack.c.b16 %v600, %v599
        %v658 = vpack.c.b16 %v602, %v601
        %v659 = vpack.c.b16 %v604, %v603
        %v660 = vpack.c.b16 %v606, %v605
        %v661 = vpack.c.b16 %v608, %v607
        %v662 = vpack.c.b16 %v610, %v609
        %v663 = vpack.c.b16 %v612, %v611
        %v664 = vpack.c.b16 %v614, %v613
        %v665 = vpack.c.b16 %v616, %v615
        %v666 = vpack.c.b16 %v618, %v617
        %v667 = vpack.c.b16 %v620, %v619
        %v668 = vpack.c.b16 %v622, %v621
        %v669 = vpack.c.b16 %v624, %v623
        %v670 = vpack.c.b16 %v626, %v625
        %v671 = vpack.c.b16 %v628, %v627
        %v672 = vpack.c.b16 %v630, %v629
        %v673 = vpack.c.b16 %v632, %v631
        %v674 = vpack.c.b16 %v634, %v633
        %v675 = vpack.c.b16 %v636, %v635
        %v676 = vpack.c.b16 %v638, %v637
        %v677 = vpack.c.b16 %v640, %v639
        %v678 = vpack.c.b16 %v642, %v641
        %v679 = vpack.c.b16 %v644, %v643
        %v680 = vpack.c.b16 %v646, %v645
        %v681 = vpack.c.b16 %v648, %v647
        %v682 = vpack.c.b16 %v650, %v649
        %v731 = vunpack.c.l.b16 %v503
        %v732 = vunpack.c.l.b16 %v504
        %v733 = vunpack.c.l.b16 %v505
        %v734 = vunpack.c.l.b16 %v506
        %v735 = vunpack.c.l.b16 %v507
        %v736 = vunpack.c.l.b16 %v508
        %v737 = vunpack.c.l.b16 %v509
        %v738 = vunpack.c.l.b16 %v510
        %v739 = vunpack.c.l.b16 %v511
        %v740 = vunpack.c.l.b16 %v512
        %v741 = vunpack.c.l.b16 %v513
        %v742 = vunpack.c.l.b16 %v514
        %v743 = vunpack.c.l.b16 %v515
        %v744 = vunpack.c.l.b16 %v516
        %v745 = vunpack.c.l.b16 %v517
        %v746 = vunpack.c.l.b16 %v518
        %v747 = vpack.c.b16 %v732, %v731
        %v748 = vpack.c.b16 %v734, %v733
        %v749 = vpack.c.b16 %v736, %v735
        %v750 = vpack.c.b16 %v738, %v737
        %v751 = vpack.c.b16 %v740, %v739
        %v752 = vpack.c.b16 %v742, %v741
        %v753 = vpack.c.b16 %v744, %v743
        %v754 = vpack.c.b16 %v746, %v745
        %763 = vmatpush.bf16.xpose.msra.mxu0 %v754
        %764 = vmatpush.bf16.xpose.msra.mxu0 %v753
        %765 = vmatpush.bf16.xpose.msra.mxu0 %v752
        %766 = vmatpush.bf16.xpose.msra.mxu0 %v751
        %767 = vmatpush.bf16.xpose.msra.mxu0 %v750
        %768 = vmatpush.bf16.xpose.msra.mxu0 %v749
        %769 = vmatpush.bf16.xpose.msra.mxu0 %v748
        %770 = vmatpush.bf16.xpose.msra.mxu0 %v747
        %771 = vmatmul.bf16.gmra.mxu0 %v651
        %v772 = vpop.f32.mrf.mxu0
        %v773 = vadd.f32 %v521, %v772
        %v774 = vpop.f32.mrf.mxu0
        %v775 = vadd.f32 %v521, %v774
        %776 = vmatmul.bf16.gmra.mxu0 %v652
        %v777 = vpop.f32.mrf.mxu0
        %v778 = vadd.f32 %v521, %v777
        %v779 = vpop.f32.mrf.mxu0
        %v780 = vadd.f32 %v521, %v779
        %781 = vmatmul.bf16.gmra.mxu0 %v653
        %v782 = vpop.f32.mrf.mxu0
        %v783 = vadd.f32 %v521, %v782
        %v784 = vpop.f32.mrf.mxu0
        %v785 = vadd.f32 %v521, %v784
        %786 = vmatmul.bf16.gmra.mxu0 %v654
        %v787 = vpop.f32.mrf.mxu0
        %v788 = vadd.f32 %v521, %v787
        %v789 = vpop.f32.mrf.mxu0
        %v790 = vadd.f32 %v521, %v789
        %791 = vmatmul.bf16.gmra.mxu0 %v655
        %v792 = vpop.f32.mrf.mxu0
        %v793 = vadd.f32 %v521, %v792
        %v794 = vpop.f32.mrf.mxu0
        %v795 = vadd.f32 %v521, %v794
        %796 = vmatmul.bf16.gmra.mxu0 %v656
        %v797 = vpop.f32.mrf.mxu0
        %v798 = vadd.f32 %v521, %v797
        %v799 = vpop.f32.mrf.mxu0
        %v800 = vadd.f32 %v521, %v799
        %801 = vmatmul.bf16.gmra.mxu0 %v657
        %v802 = vpop.f32.mrf.mxu0
        %v803 = vadd.f32 %v521, %v802
        %v804 = vpop.f32.mrf.mxu0
        %v805 = vadd.f32 %v521, %v804
        %806 = vmatmul.bf16.gmra.mxu0 %v658
        %v807 = vpop.f32.mrf.mxu0
        %v808 = vadd.f32 %v521, %v807
        %v809 = vpop.f32.mrf.mxu0
        %v810 = vadd.f32 %v521, %v809
        %811 = vmatmul.bf16.gmra.mxu0 %v659
        %v812 = vpop.f32.mrf.mxu0
        %v813 = vadd.f32 %v521, %v812
        %v814 = vpop.f32.mrf.mxu0
        %v815 = vadd.f32 %v521, %v814
        %816 = vmatmul.bf16.gmra.mxu0 %v660
        %v817 = vpop.f32.mrf.mxu0
        %v818 = vadd.f32 %v521, %v817
        %v819 = vpop.f32.mrf.mxu0
        %v820 = vadd.f32 %v521, %v819
        %821 = vmatmul.bf16.gmra.mxu0 %v661
        %v822 = vpop.f32.mrf.mxu0
        %v823 = vadd.f32 %v521, %v822
        %v824 = vpop.f32.mrf.mxu0
        %v825 = vadd.f32 %v521, %v824
        %826 = vmatmul.bf16.gmra.mxu0 %v662
        %v827 = vpop.f32.mrf.mxu0
        %v828 = vadd.f32 %v521, %v827
        %v829 = vpop.f32.mrf.mxu0
        %v830 = vadd.f32 %v521, %v829
        %831 = vmatmul.bf16.gmra.mxu0 %v663
        %v832 = vpop.f32.mrf.mxu0
        %v833 = vadd.f32 %v521, %v832
        %v834 = vpop.f32.mrf.mxu0
        %v835 = vadd.f32 %v521, %v834
        %836 = vmatmul.bf16.gmra.mxu0 %v664
        %v837 = vpop.f32.mrf.mxu0
        %v838 = vadd.f32 %v521, %v837
        %v839 = vpop.f32.mrf.mxu0
        %v840 = vadd.f32 %v521, %v839
        %841 = vmatmul.bf16.gmra.mxu0 %v665
        %v842 = vpop.f32.mrf.mxu0
        %v843 = vadd.f32 %v521, %v842
        %v844 = vpop.f32.mrf.mxu0
        %v845 = vadd.f32 %v521, %v844
        %846 = vmatmul.bf16.gmra.mxu0 %v666
        %v847 = vpop.f32.mrf.mxu0
        %v848 = vadd.f32 %v521, %v847
        %v849 = vpop.f32.mrf.mxu0
        %v850 = vadd.f32 %v521, %v849
        %851 = vmatmul.bf16.gmra.mxu0 %v667
        %v852 = vpop.f32.mrf.mxu0
        %v853 = vadd.f32 %v521, %v852
        %v854 = vpop.f32.mrf.mxu0
        %v855 = vadd.f32 %v521, %v854
        %856 = vmatmul.bf16.gmra.mxu0 %v668
        %v857 = vpop.f32.mrf.mxu0
        %v858 = vadd.f32 %v521, %v857
        %v859 = vpop.f32.mrf.mxu0
        %v860 = vadd.f32 %v521, %v859
        %861 = vmatmul.bf16.gmra.mxu0 %v669
        %v862 = vpop.f32.mrf.mxu0
        %v863 = vadd.f32 %v521, %v862
        %v864 = vpop.f32.mrf.mxu0
        %v865 = vadd.f32 %v521, %v864
        %866 = vmatmul.bf16.gmra.mxu0 %v670
        %v867 = vpop.f32.mrf.mxu0
        %v868 = vadd.f32 %v521, %v867
        %v869 = vpop.f32.mrf.mxu0
        %v870 = vadd.f32 %v521, %v869
        %871 = vmatmul.bf16.gmra.mxu0 %v671
        %v872 = vpop.f32.mrf.mxu0
        %v873 = vadd.f32 %v521, %v872
        %v874 = vpop.f32.mrf.mxu0
        %v875 = vadd.f32 %v521, %v874
        %876 = vmatmul.bf16.gmra.mxu0 %v672
        %v877 = vpop.f32.mrf.mxu0
        %v878 = vadd.f32 %v521, %v877
        %v879 = vpop.f32.mrf.mxu0
        %v880 = vadd.f32 %v521, %v879
        %881 = vmatmul.bf16.gmra.mxu0 %v673
        %v882 = vpop.f32.mrf.mxu0
        %v883 = vadd.f32 %v521, %v882
        %v884 = vpop.f32.mrf.mxu0
        %v885 = vadd.f32 %v521, %v884
        %886 = vmatmul.bf16.gmra.mxu0 %v674
        %v887 = vpop.f32.mrf.mxu0
        %v888 = vadd.f32 %v521, %v887
        %v889 = vpop.f32.mrf.mxu0
        %v890 = vadd.f32 %v521, %v889
        %891 = vmatmul.bf16.gmra.mxu0 %v675
        %v892 = vpop.f32.mrf.mxu0
        %v893 = vadd.f32 %v521, %v892
        %v894 = vpop.f32.mrf.mxu0
        %v895 = vadd.f32 %v521, %v894
        %896 = vmatmul.bf16.gmra.mxu0 %v676
        %v897 = vpop.f32.mrf.mxu0
        %v898 = vadd.f32 %v521, %v897
        %v899 = vpop.f32.mrf.mxu0
        %v900 = vadd.f32 %v521, %v899
        %901 = vmatmul.bf16.gmra.mxu0 %v677
        %v902 = vpop.f32.mrf.mxu0
        %v903 = vadd.f32 %v521, %v902
        %v904 = vpop.f32.mrf.mxu0
        %v905 = vadd.f32 %v521, %v904
        %906 = vmatmul.bf16.gmra.mxu0 %v678
        %v907 = vpop.f32.mrf.mxu0
        %v908 = vadd.f32 %v521, %v907
        %v909 = vpop.f32.mrf.mxu0
        %v910 = vadd.f32 %v521, %v909
        %911 = vmatmul.bf16.gmra.mxu0 %v679
        %v912 = vpop.f32.mrf.mxu0
        %v913 = vadd.f32 %v521, %v912
        %v914 = vpop.f32.mrf.mxu0
        %v915 = vadd.f32 %v521, %v914
        %916 = vmatmul.bf16.gmra.mxu0 %v680
        %v917 = vpop.f32.mrf.mxu0
        %v918 = vadd.f32 %v521, %v917
        %v919 = vpop.f32.mrf.mxu0
        %v920 = vadd.f32 %v521, %v919
        %921 = vmatmul.bf16.gmra.mxu0 %v681
        %v922 = vpop.f32.mrf.mxu0
        %v923 = vadd.f32 %v521, %v922
        %v924 = vpop.f32.mrf.mxu0
        %v925 = vadd.f32 %v521, %v924
        %926 = vmatmul.bf16.gmra.mxu0 %v682
        %v927 = vpop.f32.mrf.mxu0
        %v928 = vadd.f32 %v521, %v927
        %v929 = vpop.f32.mrf.mxu0
        %v930 = vadd.f32 %v521, %v929
        %931 = vdwg.mxu0
        %v932 = vmax.f32 %v773, 0.0
        %v933 = vmax.f32 %v775, 0.0
        %v934 = vmax.f32 %v778, 0.0
        %v935 = vmax.f32 %v780, 0.0
        %v936 = vmax.f32 %v783, 0.0
        %v937 = vmax.f32 %v785, 0.0
        %v938 = vmax.f32 %v788, 0.0
        %v939 = vmax.f32 %v790, 0.0
        %v940 = vmax.f32 %v793, 0.0
        %v941 = vmax.f32 %v795, 0.0
        %v942 = vmax.f32 %v798, 0.0
        %v943 = vmax.f32 %v800, 0.0
        %v944 = vmax.f32 %v803, 0.0
        %v945 = vmax.f32 %v805, 0.0
        %v946 = vmax.f32 %v808, 0.0
        %v947 = vmax.f32 %v810, 0.0
        %v948 = vmax.f32 %v813, 0.0
        %v949 = vmax.f32 %v815, 0.0
        %v950 = vmax.f32 %v818, 0.0
        %v951 = vmax.f32 %v820, 0.0
        %v952 = vmax.f32 %v823, 0.0
        %v953 = vmax.f32 %v825, 0.0
        %v954 = vmax.f32 %v828, 0.0
        %v955 = vmax.f32 %v830, 0.0
        %v956 = vmax.f32 %v833, 0.0
        %v957 = vmax.f32 %v835, 0.0
        %v958 = vmax.f32 %v838, 0.0
        %v959 = vmax.f32 %v840, 0.0
        %v960 = vmax.f32 %v843, 0.0
        %v961 = vmax.f32 %v845, 0.0
        %v962 = vmax.f32 %v848, 0.0
        %v963 = vmax.f32 %v850, 0.0
        %v964 = vmax.f32 %v853, 0.0
        %v965 = vmax.f32 %v855, 0.0
        %v966 = vmax.f32 %v858, 0.0
        %v967 = vmax.f32 %v860, 0.0
        %v968 = vmax.f32 %v863, 0.0
        %v969 = vmax.f32 %v865, 0.0
        %v970 = vmax.f32 %v868, 0.0
        %v971 = vmax.f32 %v870, 0.0
        %v972 = vmax.f32 %v873, 0.0
        %v973 = vmax.f32 %v875, 0.0
        %v974 = vmax.f32 %v878, 0.0
        %v975 = vmax.f32 %v880, 0.0
        %v976 = vmax.f32 %v883, 0.0
        %v977 = vmax.f32 %v885, 0.0
        %v978 = vmax.f32 %v888, 0.0
        %v979 = vmax.f32 %v890, 0.0
        %v980 = vmax.f32 %v893, 0.0
        %v981 = vmax.f32 %v895, 0.0
        %v982 = vmax.f32 %v898, 0.0
        %v983 = vmax.f32 %v900, 0.0
        %v984 = vmax.f32 %v903, 0.0
        %v985 = vmax.f32 %v905, 0.0
        %v986 = vmax.f32 %v908, 0.0
        %v987 = vmax.f32 %v910, 0.0
        %v988 = vmax.f32 %v913, 0.0
        %v989 = vmax.f32 %v915, 0.0
        %v990 = vmax.f32 %v918, 0.0
        %v991 = vmax.f32 %v920, 0.0
        %v992 = vmax.f32 %v923, 0.0
        %v993 = vmax.f32 %v925, 0.0
        %v994 = vmax.f32 %v928, 0.0
        %v995 = vmax.f32 %v930, 0.0
        %996 = vst [vmem:[%s296] sm:$0xff] %v932
        %997 = vst [vmem:[%s296 + $0x8] sm:$0xff] %v933
        %998 = vst [vmem:[%s296 + $0x10] sm:$0xff] %v934
        %999 = vst [vmem:[%s296 + $0x18] sm:$0xff] %v935
        %1000 = vst [vmem:[%s296 + $0x20] sm:$0xff] %v936
        %1001 = vst [vmem:[%s296 + $0x28] sm:$0xff] %v937
        %1002 = vst [vmem:[%s296 + $0x30] sm:$0xff] %v938
        %1003 = vst [vmem:[%s296 + $0x38] sm:$0xff] %v939
        %1004 = vst [vmem:[%s296 + $0x40] sm:$0xff] %v940
        %1005 = vst [vmem:[%s296 + $0x48] sm:$0xff] %v941
        %1006 = vst [vmem:[%s296 + $0x50] sm:$0xff] %v942
        %1007 = vst [vmem:[%s296 + $0x58] sm:$0xff] %v943
        %1008 = vst [vmem:[%s296 + $0x60] sm:$0xff] %v944
        %1009 = vst [vmem:[%s296 + $0x68] sm:$0xff] %v945
        %1010 = vst [vmem:[%s296 + $0x70] sm:$0xff] %v946
        %1011 = vst [vmem:[%s296 + $0x78] sm:$0xff] %v947
        %1012 = vst [vmem:[%s296 + $0x80] sm:$0xff] %v948
        %1013 = vst [vmem:[%s296 + $0x88] sm:$0xff] %v949
        %1014 = vst [vmem:[%s296 + $0x90] sm:$0xff] %v950
        %1015 = vst [vmem:[%s296 + $0x98] sm:$0xff] %v951
        %1016 = vst [vmem:[%s296 + $0xa0] sm:$0xff] %v952
        %1017 = vst [vmem:[%s296 + $0xa8] sm:$0xff] %v953
        %1018 = vst [vmem:[%s296 + $0xb0] sm:$0xff] %v954
        %1019 = vst [vmem:[%s296 + $0xb8] sm:$0xff] %v955
        %1020 = vst [vmem:[%s296 + $0xc0] sm:$0xff] %v956
        %1021 = vst [vmem:[%s296 + $0xc8] sm:$0xff] %v957
        %1022 = vst [vmem:[%s296 + $0xd0] sm:$0xff] %v958
        %1023 = vst [vmem:[%s296 + $0xd8] sm:$0xff] %v959
        %1024 = vst [vmem:[%s296 + $0xe0] sm:$0xff] %v960
        %1025 = vst [vmem:[%s296 + $0xe8] sm:$0xff] %v961
        %1026 = vst [vmem:[%s296 + $0xf0] sm:$0xff] %v962
        %1027 = vst [vmem:[%s296 + $0xf8] sm:$0xff] %v963
        %1028 = vst [vmem:[%s296 + $0x100] sm:$0xff] %v964
        %1029 = vst [vmem:[%s296 + $0x108] sm:$0xff] %v965
        %1030 = vst [vmem:[%s296 + $0x110] sm:$0xff] %v966
        %1031 = vst [vmem:[%s296 + $0x118] sm:$0xff] %v967
        %1032 = vst [vmem:[%s296 + $0x120] sm:$0xff] %v968
        %1033 = vst [vmem:[%s296 + $0x128] sm:$0xff] %v969
        %1034 = vst [vmem:[%s296 + $0x130] sm:$0xff] %v970
        %1035 = vst [vmem:[%s296 + $0x138] sm:$0xff] %v971
        %1036 = vst [vmem:[%s296 + $0x140] sm:$0xff] %v972
        %1037 = vst [vmem:[%s296 + $0x148] sm:$0xff] %v973
        %1038 = vst [vmem:[%s296 + $0x150] sm:$0xff] %v974
        %1039 = vst [vmem:[%s296 + $0x158] sm:$0xff] %v975
        %1040 = vst [vmem:[%s296 + $0x160] sm:$0xff] %v976
        %1041 = vst [vmem:[%s296 + $0x168] sm:$0xff] %v977
        %1042 = vst [vmem:[%s296 + $0x170] sm:$0xff] %v978
        %1043 = vst [vmem:[%s296 + $0x178] sm:$0xff] %v979
        %1044 = vst [vmem:[%s296 + $0x180] sm:$0xff] %v980
        %1045 = vst [vmem:[%s296 + $0x188] sm:$0xff] %v981
        %1046 = vst [vmem:[%s296 + $0x190] sm:$0xff] %v982
        %1047 = vst [vmem:[%s296 + $0x198] sm:$0xff] %v983
        %1048 = vst [vmem:[%s296 + $0x1a0] sm:$0xff] %v984
        %1049 = vst [vmem:[%s296 + $0x1a8] sm:$0xff] %v985
        %1050 = vst [vmem:[%s296 + $0x1b0] sm:$0xff] %v986
        %1051 = vst [vmem:[%s296 + $0x1b8] sm:$0xff] %v987
        %1052 = vst [vmem:[%s296 + $0x1c0] sm:$0xff] %v988
        %1053 = vst [vmem:[%s296 + $0x1c8] sm:$0xff] %v989
        %1054 = vst [vmem:[%s296 + $0x1d0] sm:$0xff] %v990
        %1055 = vst [vmem:[%s296 + $0x1d8] sm:$0xff] %v991
        %1056 = vst [vmem:[%s296 + $0x1e0] sm:$0xff] %v992
        %1057 = vst [vmem:[%s296 + $0x1e8] sm:$0xff] %v993
        %1058 = vst [vmem:[%s296 + $0x1f0] sm:$0xff] %v994
        %1059 = vst [vmem:[%s296 + $0x1f8] sm:$0xff] %v995
        %s1060 = sand.u32 %s140, 1
        %s1061 = scalar_lea.sflag [#allocation4], %s1060
        %s1062 = sand.u32 %s140, 1
        %s1063 = smul.addr %s1062, 512
        %s1064 = scalar_lea.vmem [#allocation8], %s1063
        // Predicated region
        $region49: #{tpu_custom_call.1} parent=35 // pred_check
          %p1065 = pneg %p150
        $region50: #{tpu_custom_call.1} parent=35 // pred_check_branch
          %1067 = sbr.rel (%p1065) target = $region52
        $region51: #{tpu_custom_call.1} parent=35 // pred_region
          %s1068 = smul.u32 64, %s24
          %1070 = vsyncadd %s1061, 0
          %s1071 = smul.addr %s1068, 8
          %s1072 = scalar_lea.hbm %s4, %s1071
          %s1073 = sshll.u32 %s1064, 4
          %s1074 = int_to_ptr.vmem [resolvable:$true] %s1073
          %s1075 = sshll.u32 %s1072, 4
          %s1076 = int_to_ptr.hbm [resolvable:$true] %s1075
          %1081 = dma.vmem_to_hbm [thread:$0]  %s1074, 8192, %s1076, %s1061, 128, 128, 8
        $region52: #{tpu_custom_call.1} parent=35 // pred_fallthru
          _
      $region36: #{tpu_custom_call.1} parent=5 // pred_fallthru
        _
      %p1082 = scmp.le.s32.totalorder 2, %s19
      // Predicated region
      $region53: #{tpu_custom_call.1} parent=5 // pred_check
        %p1083 = pneg %p1082
      $region54: #{tpu_custom_call.1} parent=5 // pred_check_branch
        %1085 = sbr.rel (%p1083) target = $region56
      $region55: #{tpu_custom_call.1} parent=5 // pred_region
        %s1086 = ssub.s32 %s19, 2
        // Predicated region
        $region57: #{tpu_custom_call.1} parent=55 // pred_check
          %p1087 = pneg %p156
        $region58: #{tpu_custom_call.1} parent=55 // pred_check_branch
          %1089 = sbr.rel (%p1087) target = $region60
        $region59: #{tpu_custom_call.1} parent=55 // pred_region
          %s1090 = sand.u32 %s141, 1
          %s1091 = scalar_lea.sflag [#allocation4], %s1090
          %s1092 = sand.u32 %s141, 1
          %s1093 = smul.addr %s1092, 512
          %s1094 = scalar_lea.vmem [#allocation8], %s1093
          %1096 = dma.done %s1091, 8192
        $region60: #{tpu_custom_call.1} parent=55 // pred_fallthru
          _
      $region56: #{tpu_custom_call.1} parent=5 // pred_fallthru
        _
    $region6: #{tpu_custom_call.1} parent=1 // loop_footer
      %s23 = sadd.s32 1, %s19
    $region7: #{tpu_custom_call.1} parent=1 // loop_footer_branch
      %18 = sbr.rel target = $region3
    $region8: #{tpu_custom_call.1} parent=1 // loop_exit
      _
    %1097 = vsyncpa [#allocation3], 1
    %s1098 = scalar_lea.sflag [#allocation3], 1
    %1099 = vsyncpa %s1098, 1
    %1100 = vsyncpa [#allocation6], 1
    %s1101 = scalar_lea.sflag [#allocation6], 1
    %1102 = vsyncpa %s1101, 1
    %1103 = vsyncpa [#allocation4], 1
    %s1104 = scalar_lea.sflag [#allocation4], 1
    %1105 = vsyncpa %s1104, 1

</llo_original>
